<compile_context>
chip_gen: v6e
topology: v6e:2x2x1
jax: 0.10.0
libtpu: 0.0.40
codegen_flags: <defaults>
</compile_context>

<pallas_src>
import functools

import jax
import jax.numpy as jnp
from jax.experimental import pallas as pl
from jax.experimental.pallas import tpu as pltpu

LANE = 128       # lane width / MXU-native feature dim
SUBLANE = 8      # f32 sublane granularity
BF16_ROWS = 16   # bf16 sublane-pack granularity (keeps weight-slab slices tile-aligned)


def _round_up(x, m):
    return ((x + m - 1) // m) * m


def dqn_kernel(x_ref, w_ref, b_ref, o_ref, *, size_in, size_out, in_rows, hid_pad):
    """One batch tile of the fused 3-layer MLP.

    x_ref: (TB, size_in) f32   -- raw input rows, cast to bf16 here (not in wrapper)
    w_ref: (in_rows + 2*hid_pad, wmax) bf16  -- [w1; w2; w3], zero padded, resident
    b_ref: (24, wmax) f32                    -- rows 0/8/16 hold b1/b2/b3, resident
    o_ref: (TB, size_out) f32  -- narrow full-dim output block (small writeback)
    """
    x = x_ref[...].astype(jnp.bfloat16)                       # bf16 MXU operand

    # Static, tile-aligned slices of the resident parameter slabs.
    w1 = w_ref[0:size_in, 0:hid_pad]                           # (size_in, hid_pad)
    w2 = w_ref[in_rows:in_rows + hid_pad, 0:hid_pad]           # (hid_pad, hid_pad)
    w3 = w_ref[in_rows + hid_pad:in_rows + 2 * hid_pad, :]     # (hid_pad, wmax)
    b1 = b_ref[0:1, 0:hid_pad]                                 # f32 (1, hid_pad)
    b2 = b_ref[8:9, 0:hid_pad]
    b3 = b_ref[16:17, :]                                       # f32 (1, wmax)

    # Layer 1: bf16 MXU matmul, f32 accumulate, f32 bias + ReLU.
    h1 = jnp.dot(x, w1, preferred_element_type=jnp.float32) + b1
    h1 = jnp.maximum(h1, 0.0).astype(jnp.bfloat16)

    # Layer 2.
    h2 = jnp.dot(h1, w2, preferred_element_type=jnp.float32) + b2
    h2 = jnp.maximum(h2, 0.0).astype(jnp.bfloat16)

    # Layer 3 (no activation): lane-dense matmul, narrow f32 store.
    out = jnp.dot(h2, w3, preferred_element_type=jnp.float32) + b3   # (TB, wmax)
    o_ref[...] = out[:, 0:size_out]


def pack_dqn_params(params, size_in, size_out):
    """Pad + pack the 6 parameter tensors into 2 slabs (do once, reuse across calls)."""
    hid = params["w1"].shape[1]
    in_rows = _round_up(size_in, BF16_ROWS)       # keep w2/w3 row offsets bf16-tile aligned
    hid_pad = _round_up(hid, LANE)
    out_pad = _round_up(size_out, LANE)
    wmax = max(hid_pad, out_pad)

    w = jnp.zeros((in_rows + 2 * hid_pad, wmax), jnp.float32)
    w = w.at[:size_in, :hid].set(params["w1"])
    w = w.at[in_rows:in_rows + hid, :hid].set(params["w2"])
    w = w.at[in_rows + hid_pad:in_rows + hid_pad + hid, :size_out].set(params["w3"])
    w = w.astype(jnp.bfloat16)                    # halve weight DMA bytes, bf16 MXU

    b = jnp.zeros((3 * SUBLANE, wmax), jnp.float32)   # sublane-aligned bias rows
    b = b.at[0, :hid].set(params["b1"][0])
    b = b.at[8, :hid].set(params["b2"][0])
    b = b.at[16, :size_out].set(params["b3"][0])

    return {"w": w, "b": b, "in_rows": in_rows, "hid_pad": hid_pad,
            "size_in": size_in, "size_out": size_out}


def dqn_forward(x, packed, *, block_batch=1024):
    """Pallas forward. x: (batch, size_in) f32. Returns (batch, size_out) f32."""
    batch = x.shape[0]
    size_in, size_out = packed["size_in"], packed["size_out"]
    in_rows, hid_pad = packed["in_rows"], packed["hid_pad"]

    # ---- batch tile selection ------------------------------------------------
    # Large tiles amortize per-grid-step overhead (the kernel is HBM/overhead
    # bound).  Keep >= 2 grid steps for big single-tile batches so the
    # "parallel" batch axis can shard across v7x's two TensorCores.  Even
    # tb=4096 keeps VMEM usage in the low MiB range (weight slab ~= 96 KiB).
    padded_rows = _round_up(batch, SUBLANE)
    tb = min(block_batch, padded_rows)
    if tb == padded_rows and batch > 256:
        tb = _round_up(pl.cdiv(padded_rows, 2), SUBLANE)
    padded_batch = _round_up(batch, tb)

    # Only the batch dim may ever need padding; no feature pad, no dtype cast
    # in the wrapper (the bf16 cast happens inside the kernel).
    x_in = x
    if padded_batch != batch:
        x_in = jnp.pad(x, ((0, padded_batch - batch), (0, 0)))

    kernel = functools.partial(dqn_kernel, size_in=size_in, size_out=size_out,
                               in_rows=in_rows, hid_pad=hid_pad)

    out = pl.pallas_call(
        kernel,
        out_shape=jax.ShapeDtypeStruct((padded_batch, size_out), jnp.float32),
        grid=(padded_batch // tb,),
        in_specs=[
            pl.BlockSpec((tb, size_in), lambda i: (i, 0)),        # x: streamed raw f32
            pl.BlockSpec(packed["w"].shape, lambda i: (0, 0)),    # weights: VMEM-resident
            pl.BlockSpec(packed["b"].shape, lambda i: (0, 0)),    # biases: VMEM-resident
        ],
        out_specs=pl.BlockSpec((tb, size_out), lambda i: (i, 0)),  # narrow full-dim store
        compiler_params=pltpu.CompilerParams(
            dimension_semantics=("parallel",),                     # v7x: shard batch over 2 TCs
        ),
    )(x_in, packed["w"], packed["b"])

    return out[:batch] if padded_batch != batch else out


def init_dqn_params(key, size_in, size_out, hidden=20):
    """nn.Linear-style U(-1/sqrt(fan_in), 1/sqrt(fan_in)) init, (in, out) layout."""
    def linear(key, fan_in, fan_out):
        kw, kb = jax.random.split(key)
        bound = 1.0 / jnp.sqrt(float(fan_in))
        w = jax.random.uniform(kw, (fan_in, fan_out), jnp.float32, -bound, bound)
        b = jax.random.uniform(kb, (1, fan_out), jnp.float32, -bound, bound)
        return w, b

    k1, k2, k3 = jax.random.split(key, 3)
    w1, b1 = linear(k1, size_in, hidden)
    w2, b2 = linear(k2, hidden, hidden)
    w3, b3 = linear(k3, hidden, size_out)
    return {"w1": w1, "b1": b1, "w2": w2, "b2": b2, "w3": w3, "b3": b3}


def dqn_forward_ref(x, params):
    """Pure-JAX f32 reference (matches the PyTorch module semantics)."""
    h1 = jnp.maximum(x @ params["w1"] + params["b1"], 0.0)
    h2 = jnp.maximum(h1 @ params["w2"] + params["b2"], 0.0)
    return h2 @ params["w3"] + params["b3"]


if __name__ == "__main__":
    key = jax.random.PRNGKey(0)
    k_param, k_x = jax.random.split(key)

    batch, size_in, size_out = 8, 32, 4
    params = init_dqn_params(k_param, size_in, size_out)
    packed = pack_dqn_params(params, size_in, size_out)   # one-time packing; reuse across calls
    x = jax.random.normal(k_x, (batch, size_in), jnp.float32)

    # jit so the (minimal) wrapper pad/slice ops fuse around the pallas_call;
    # at batch=8 this path is launch/latency bound by construction.
    fwd = jax.jit(functools.partial(dqn_forward, packed=packed))
    out = jax.block_until_ready(fwd(x))

    ref = dqn_forward_ref(x, params)
    assert out.shape == (batch, size_out)
    # bf16 matmul inputs with f32 accumulation -> loosened tolerance vs f32 ref.
    assert jnp.allclose(out, ref, atol=3e-2, rtol=3e-2), (out, ref)

    print("KERNEL_OK")
</pallas_src>

<mosaic_0001>
module attributes {stable_mosaic.version = 11 : i64} {
  func.func @dqn_kernel(%arg0: i32, %arg1: memref<8x32xf32, #tpu.memory_space<vmem>>, %arg2: memref<288x128xbf16, #tpu.memory_space<vmem>>, %arg3: memref<24x128xf32, #tpu.memory_space<vmem>>, %arg4: memref<8x4xf32, #tpu.memory_space<vmem>>) attributes {dimension_semantics = [#tpu.dimension_semantics<parallel>], iteration_bounds = array<i64: 1>, scalar_prefetch = 0 : i64, scratch_operands = 0 : i64, tpu.core_type = #tpu.core_type<tc>, window_params = [{transform_indices = @transform_0, window_bounds = array<i64: 8, 32>}, {pipeline_mode = #tpu.pipeline_mode<synchronous>, transform_indices = @transform_1, window_bounds = array<i64: 288, 128>}, {pipeline_mode = #tpu.pipeline_mode<synchronous>, transform_indices = @transform_2, window_bounds = array<i64: 24, 128>}, {transform_indices = @transform_3, window_bounds = array<i64: 8, 4>}]} {
    %c0 = arith.constant 0 : index
    %c0_0 = arith.constant 0 : index
    %0 = vector.load %arg1[%c0, %c0_0] : memref<8x32xf32, #tpu.memory_space<vmem>>, vector<8x32xf32>
    %1 = arith.truncf %0 : vector<8x32xf32> to vector<8x32xbf16>
    %c0_1 = arith.constant 0 : index
    %c0_2 = arith.constant 0 : index
    %2 = vector.load %arg2[%c0_1, %c0_2] : memref<288x128xbf16, #tpu.memory_space<vmem>>, vector<32x128xbf16>
    %c32 = arith.constant 32 : index
    %c0_3 = arith.constant 0 : index
    %3 = vector.load %arg2[%c32, %c0_3] : memref<288x128xbf16, #tpu.memory_space<vmem>>, vector<128x128xbf16>
    %c160 = arith.constant 160 : index
    %c0_4 = arith.constant 0 : index
    %4 = vector.load %arg2[%c160, %c0_4] : memref<288x128xbf16, #tpu.memory_space<vmem>>, vector<128x128xbf16>
    %c0_5 = arith.constant 0 : index
    %c0_6 = arith.constant 0 : index
    %5 = vector.load %arg3[%c0_5, %c0_6] : memref<24x128xf32, #tpu.memory_space<vmem>>, vector<1x128xf32>
    %c8 = arith.constant 8 : index
    %c0_7 = arith.constant 0 : index
    %6 = vector.load %arg3[%c8, %c0_7] : memref<24x128xf32, #tpu.memory_space<vmem>>, vector<1x128xf32>
    %c16 = arith.constant 16 : index
    %c0_8 = arith.constant 0 : index
    %7 = vector.load %arg3[%c16, %c0_8] : memref<24x128xf32, #tpu.memory_space<vmem>>, vector<1x128xf32>
    %cst = arith.constant dense<0.000000e+00> : vector<8x128xf32>
    %8 = tpu.matmul %1, %2, %cst {dimension_numbers = #tpu.dot_dimension_numbers<[1], [0], [0], [1], [0, 0, 1, 1], [], []>} : vector<8x32xbf16>, vector<32x128xbf16>, vector<8x128xf32> -> vector<8x128xf32>
    %9 = vector.broadcast %5 : vector<1x128xf32> to vector<8x128xf32>
    %10 = arith.addf %8, %9 : vector<8x128xf32>
    %cst_9 = arith.constant 0.000000e+00 : f32
    %11 = vector.broadcast %cst_9 : f32 to vector<8x128xf32>
    %12 = arith.maximumf %10, %11 : vector<8x128xf32>
    %13 = arith.truncf %12 : vector<8x128xf32> to vector<8x128xbf16>
    %cst_10 = arith.constant dense<0.000000e+00> : vector<8x128xf32>
    %14 = tpu.matmul %13, %3, %cst_10 {dimension_numbers = #tpu.dot_dimension_numbers<[1], [0], [0], [1], [0, 0, 1, 1], [], []>} : vector<8x128xbf16>, vector<128x128xbf16>, vector<8x128xf32> -> vector<8x128xf32>
    %15 = vector.broadcast %6 : vector<1x128xf32> to vector<8x128xf32>
    %16 = arith.addf %14, %15 : vector<8x128xf32>
    %cst_11 = arith.constant 0.000000e+00 : f32
    %17 = vector.broadcast %cst_11 : f32 to vector<8x128xf32>
    %18 = arith.maximumf %16, %17 : vector<8x128xf32>
    %19 = arith.truncf %18 : vector<8x128xf32> to vector<8x128xbf16>
    %cst_12 = arith.constant dense<0.000000e+00> : vector<8x128xf32>
    %20 = tpu.matmul %19, %4, %cst_12 {dimension_numbers = #tpu.dot_dimension_numbers<[1], [0], [0], [1], [0, 0, 1, 1], [], []>} : vector<8x128xbf16>, vector<128x128xbf16>, vector<8x128xf32> -> vector<8x128xf32>
    %21 = vector.broadcast %7 : vector<1x128xf32> to vector<8x128xf32>
    %22 = arith.addf %20, %21 : vector<8x128xf32>
    %23 = vector.extract_strided_slice %22 {offsets = [0, 0], sizes = [8, 4], strides = [1, 1]} : vector<8x128xf32> to vector<8x4xf32>
    %c0_13 = arith.constant 0 : index
    %c0_14 = arith.constant 0 : index
    %24 = vector.load %arg4[%c0_13, %c0_14] : memref<8x4xf32, #tpu.memory_space<vmem>>, vector<8x4xf32>
    tpu.vector_store %arg4[%c0_13, %c0_14], %23 {strides = array<i32>} : memref<8x4xf32, #tpu.memory_space<vmem>>, vector<8x4xf32>,
    return
  }
  func.func @transform_0(%arg0: i32) -> (i32, i32) {
    %c0_i32 = arith.constant 0 : i32
    %c0_i32_0 = arith.constant 0 : i32
    return %arg0, %c0_i32 : i32, i32
  }
  func.func @transform_1(%arg0: i32) -> (i32, i32) {
    %c0_i32 = arith.constant 0 : i32
    %c0_i32_0 = arith.constant 0 : i32
    %c0_i32_1 = arith.constant 0 : i32
    return %c0_i32, %c0_i32_0 : i32, i32
  }
  func.func @transform_2(%arg0: i32) -> (i32, i32) {
    %c0_i32 = arith.constant 0 : i32
    %c0_i32_0 = arith.constant 0 : i32
    %c0_i32_1 = arith.constant 0 : i32
    return %c0_i32, %c0_i32_0 : i32, i32
  }
  func.func @transform_3(%arg0: i32) -> (i32, i32) {
    %c0_i32 = arith.constant 0 : i32
    %c0_i32_0 = arith.constant 0 : i32
    return %arg0, %c0_i32 : i32, i32
  }
}

</mosaic_0001>

<llo_original>
// kernel: dqn_forward.1
$region0: #{dqn_forward.1}
  #allocation0 [shape = 'u32[]', space=smem, size = 0x4, offset = 0x4, fixed_abs, tag = 'smem constant byte address 0x4 - core index']
  #allocation1 [shape = 'u32[144,128]{1,0:T(1,128)}', space=vmem, size = 0x12000, scoped, tag = 'internal scratch']
  %s0 = inlined_call_operand.hbm [shape: f32[8,32], index: 0, kind: input, shape index: {}]
  %s1 = inlined_call_operand.hbm [shape: bf16[288,128], index: 1, kind: input, shape index: {}]
  %s2 = inlined_call_operand.hbm [shape: f32[24,128], index: 2, kind: input, shape index: {}]
  %s3 = inlined_call_operand.vmem [shape: f32[8,4], index: 3, kind: output, shape index: {}]
  %s4 = sld [smem:[#allocation0]]
  $region34: #{dqn_forward.1} parent=0
    _
  %s6 = ssub.s32 1, %s4
  %s7 = scalar_select 0, %s6, %s4
  $region1: #{dqn_forward.1} parent=0
    #allocation2 [shape = 'u8[4096]{0}', space=vmem, size = 0x1000, scoped, tag = 'input window, operand 0, single buffered']
    #allocation3 [shape = 's32[1]{0}', space=sflag, size = 0x4, scoped, tag = 'scoped memory for dqn_forward.1']
    #allocation4 [shape = 'u8[73728]{0}', space=vmem, size = 0x12000, scoped, tag = 'input window, operand 1, single buffered']
    #allocation5 [shape = 's32[1]{0}', space=sflag, size = 0x4, scoped, tag = 'scoped memory for dqn_forward.1']
    #allocation6 [shape = 'u8[12288]{0}', space=vmem, size = 0x3000, scoped, tag = 'input window, operand 2, single buffered']
    %8 = vsyncpa [#allocation3], 0
    %9 = vsyncpa [#allocation5], 0
    // Predicated region
    $region2: #{dqn_forward.1} parent=1 // pred_check
      _
    $region3: #{dqn_forward.1} parent=1 // pred_check_branch
      %11 = sbr.rel (0) target = $region5
    $region4: #{dqn_forward.1} parent=1 // pred_region
      %s13 = ssub.s32 128, 128
      %14 = vsyncadd [#allocation3], %s13
      %s16 = sshll.u32 [#allocation2], 4
      %s17 = int_to_ptr.vmem [resolvable:$true] %s16
      %19 = dma.hbm_to_vmem [thread:$0]  %s0, 128, %s17, [#allocation3]
    $region5: #{dqn_forward.1} parent=1 // pred_fallthru
      _
    // Predicated region
    $region6: #{dqn_forward.1} parent=1 // pred_check
      _
    $region7: #{dqn_forward.1} parent=1 // pred_check_branch
      %21 = sbr.rel (0) target = $region9
    $region8: #{dqn_forward.1} parent=1 // pred_region
      %s23 = ssub.s32 2304, 2304
      %24 = vsyncadd [#allocation5], %s23
      %s25 = sshll.u32 [#allocation4], 4
      %s26 = int_to_ptr.vmem [resolvable:$true] %s25
      %31 = dma.hbm_to_vmem [thread:$0]  %s1, 2304, %s26, [#allocation5], 64, 64, 4
    $region9: #{dqn_forward.1} parent=1 // pred_fallthru
      _
    // Predicated region
    $region10: #{dqn_forward.1} parent=1 // pred_check
      _
    $region11: #{dqn_forward.1} parent=1 // pred_check_branch
      %33 = sbr.rel (0) target = $region13
    $region12: #{dqn_forward.1} parent=1 // pred_region
      %s35 = ssub.s32 384, 384
      %36 = vsyncadd [#allocation5], %s35
      %s37 = sshll.u32 [#allocation6], 4
      %s38 = int_to_ptr.vmem [resolvable:$true] %s37
      %43 = dma.hbm_to_vmem [thread:$0]  %s2, 384, %s38, [#allocation5], 128, 128, 8
    $region13: #{dqn_forward.1} parent=1 // pred_fallthru
      _
    // Predicated region
    $region14: #{dqn_forward.1} parent=1 // pred_check
      _
    $region15: #{dqn_forward.1} parent=1 // pred_check_branch
      %45 = sbr.rel (0) target = $region17
    $region16: #{dqn_forward.1} parent=1 // pred_region
      %46 = dma.done [#allocation3], 128
    $region17: #{dqn_forward.1} parent=1 // pred_fallthru
      _
    // Predicated region
    $region18: #{dqn_forward.1} parent=1 // pred_check
      _
    $region19: #{dqn_forward.1} parent=1 // pred_check_branch
      %48 = sbr.rel (0) target = $region21
    $region20: #{dqn_forward.1} parent=1 // pred_region
      %49 = dma.done [#allocation5], 2304
    $region21: #{dqn_forward.1} parent=1 // pred_fallthru
      _
    // Predicated region
    $region22: #{dqn_forward.1} parent=1 // pred_check
      _
    $region23: #{dqn_forward.1} parent=1 // pred_check_branch
      %51 = sbr.rel (0) target = $region25
    $region24: #{dqn_forward.1} parent=1 // pred_region
      %52 = dma.done [#allocation5], 384
    $region25: #{dqn_forward.1} parent=1 // pred_fallthru
      _
    %v54 = vld [vmem:[#allocation2] sm:$0xff]
    %v55 = vpack.c.bf16 %v54, %v54
    %v56 = vld [vmem:[#allocation4] sm:$0xf]
    %v57 = vld [vmem:[#allocation4 + $0x4] sm:$0xf]
    %v58 = vld [vmem:[#allocation4 + $0x8] sm:$0xf]
    %v59 = vld [vmem:[#allocation4 + $0xc] sm:$0xf]
    %v60 = vld [vmem:[#allocation4 + $0x10] sm:$0xf]
    %v61 = vld [vmem:[#allocation4 + $0x14] sm:$0xf]
    %v62 = vld [vmem:[#allocation4 + $0x18] sm:$0xf]
    %v63 = vld [vmem:[#allocation4 + $0x1c] sm:$0xf]
    %v64 = vld [vmem:[#allocation4 + $0x20] sm:$0xf]
    %v65 = vld [vmem:[#allocation4 + $0x24] sm:$0xf]
    %v66 = vld [vmem:[#allocation4 + $0x28] sm:$0xf]
    %v67 = vld [vmem:[#allocation4 + $0x2c] sm:$0xf]
    %v68 = vld [vmem:[#allocation4 + $0x30] sm:$0xf]
    %v69 = vld [vmem:[#allocation4 + $0x34] sm:$0xf]
    %v70 = vld [vmem:[#allocation4 + $0x38] sm:$0xf]
    %v71 = vld [vmem:[#allocation4 + $0x3c] sm:$0xf]
    %v72 = vld [vmem:[#allocation4 + $0x40] sm:$0xf]
    %v73 = vld [vmem:[#allocation4 + $0x44] sm:$0xf]
    %v74 = vld [vmem:[#allocation4 + $0x48] sm:$0xf]
    %v75 = vld [vmem:[#allocation4 + $0x4c] sm:$0xf]
    %v76 = vld [vmem:[#allocation4 + $0x50] sm:$0xf]
    %v77 = vld [vmem:[#allocation4 + $0x54] sm:$0xf]
    %v78 = vld [vmem:[#allocation4 + $0x58] sm:$0xf]
    %v79 = vld [vmem:[#allocation4 + $0x5c] sm:$0xf]
    %v80 = vld [vmem:[#allocation4 + $0x60] sm:$0xf]
    %v81 = vld [vmem:[#allocation4 + $0x64] sm:$0xf]
    %v82 = vld [vmem:[#allocation4 + $0x68] sm:$0xf]
    %v83 = vld [vmem:[#allocation4 + $0x6c] sm:$0xf]
    %v84 = vld [vmem:[#allocation4 + $0x70] sm:$0xf]
    %v85 = vld [vmem:[#allocation4 + $0x74] sm:$0xf]
    %v86 = vld [vmem:[#allocation4 + $0x78] sm:$0xf]
    %v87 = vld [vmem:[#allocation4 + $0x7c] sm:$0xf]
    %v88 = vld [vmem:[#allocation4 + $0x80] sm:$0xf]
    %v89 = vld [vmem:[#allocation4 + $0x84] sm:$0xf]
    %v90 = vld [vmem:[#allocation4 + $0x88] sm:$0xf]
    %v91 = vld [vmem:[#allocation4 + $0x8c] sm:$0xf]
    %v92 = vld [vmem:[#allocation6] sm:$0x1]
    %v93 = vld [vmem:[#allocation6 + $0x8] sm:$0x1]
    %v94 = vld [vmem:[#allocation6 + $0x10] sm:$0x1]
    %v95 = vlaneseq
    %v96 = vshrl.u32 %v95, 7
    %v97 = vsub.s32 0, %v96
    %v98 = vrot.slane %v92, %v97
    %v103 = vunpack.c.l.b16 %v56
    %v104 = vunpack.c.l.b16 %v57
    %v105 = vunpack.c.l.b16 %v58
    %v106 = vunpack.c.l.b16 %v59
    %v107 = vpack.c.b16 %v104, %v103
    %v108 = vpack.c.b16 %v106, %v105
    %vm111 = vcmask 261120
    %v113 = vsel %vm111, %v55, 0
    %115 = vmatprep.subr.bf16.mxu0 0
    %116 = vmatpush1.bf16.msra.mxu0 0
    %117 = vmatprep.subr.bf16.mxu0 0
    %118 = vmatpush1.bf16.msra.mxu0 0
    %119 = vmatprep.subr.bf16.mxu0 0
    %120 = vmatpush1.bf16.msra.mxu0 0
    %121 = vmatprep.subr.bf16.mxu0 0
    %122 = vmatpush1.bf16.msra.mxu0 0
    %123 = vmatprep.subr.bf16.mxu0 0
    %124 = vmatpush1.bf16.msra.mxu0 0
    %125 = vmatprep.subr.bf16.mxu0 0
    %126 = vmatpush1.bf16.msra.mxu0 0
    %127 = vmatprep.subr.bf16.mxu0 0
    %128 = vmatpush1.bf16.msra.mxu0 %v108
    %129 = vmatprep.subr.bf16.mxu0 0
    %130 = vmatpush1.bf16.msra.mxu0 %v107
    %131 = vmatprep.subr.bf16.mxu0 0
    %132 = vmatpush2.bf16.msra.mxu0 0
    %133 = vmatprep.subr.bf16.mxu0 0
    %134 = vmatpush2.bf16.msra.mxu0 0
    %135 = vmatprep.subr.bf16.mxu0 0
    %136 = vmatpush2.bf16.msra.mxu0 0
    %137 = vmatprep.subr.bf16.mxu0 0
    %138 = vmatpush2.bf16.msra.mxu0 0
    %139 = vmatprep.subr.bf16.mxu0 0
    %140 = vmatpush2.bf16.msra.mxu0 0
    %141 = vmatprep.subr.bf16.mxu0 0
    %142 = vmatpush2.bf16.msra.mxu0 0
    %143 = vmatprep.subr.bf16.mxu0 0
    %144 = vmatpush2.bf16.msra.mxu0 0
    %145 = vmatprep.subr.bf16.mxu0 0
    %146 = vmatpush2.bf16.msra.mxu0 0
    %147 = vmatprep.mubr.bf16.mxu0 0
    %148 = vmatmul.mubr.bf16.gmra.mxu0 %v113
    %v149 = vpop.f32.mrf.mxu0
    %v150 = vadd.f32 %v98, %v149
    %v151 = vpop.f32.mrf.mxu0
    %v152 = vpop.f32.mrf.mxu0
    %v153 = vpop.f32.mrf.mxu0
    %154 = vdwg.mxu0
    %v155 = vmax.f32 %v150, 0.0
    %v156 = vpack.c.bf16 %v155, %v155
    %v157 = vlaneseq
    %v158 = vshrl.u32 %v157, 7
    %v159 = vsub.s32 0, %v158
    %v160 = vrot.slane %v93, %v159
    %v177 = vunpack.c.l.b16 %v60
    %v178 = vunpack.c.l.b16 %v61
    %v179 = vunpack.c.l.b16 %v62
    %v180 = vunpack.c.l.b16 %v63
    %v181 = vunpack.c.l.b16 %v64
    %v182 = vunpack.c.l.b16 %v65
    %v183 = vunpack.c.l.b16 %v66
    %v184 = vunpack.c.l.b16 %v67
    %v185 = vunpack.c.l.b16 %v68
    %v186 = vunpack.c.l.b16 %v69
    %v187 = vunpack.c.l.b16 %v70
    %v188 = vunpack.c.l.b16 %v71
    %v189 = vunpack.c.l.b16 %v72
    %v190 = vunpack.c.l.b16 %v73
    %v191 = vunpack.c.l.b16 %v74
    %v192 = vunpack.c.l.b16 %v75
    %v193 = vpack.c.b16 %v178, %v177
    %v194 = vpack.c.b16 %v180, %v179
    %v195 = vpack.c.b16 %v182, %v181
    %v196 = vpack.c.b16 %v184, %v183
    %v197 = vpack.c.b16 %v186, %v185
    %v198 = vpack.c.b16 %v188, %v187
    %v199 = vpack.c.b16 %v190, %v189
    %v200 = vpack.c.b16 %v192, %v191
    %209 = vmatprep.subr.bf16.mxu0 0
    %210 = vmatpush1.bf16.msra.mxu0 %v200
    %211 = vmatprep.subr.bf16.mxu0 0
    %212 = vmatpush1.bf16.msra.mxu0 %v199
    %213 = vmatprep.subr.bf16.mxu0 0
    %214 = vmatpush1.bf16.msra.mxu0 %v198
    %215 = vmatprep.subr.bf16.mxu0 0
    %216 = vmatpush1.bf16.msra.mxu0 %v197
    %217 = vmatprep.subr.bf16.mxu0 0
    %218 = vmatpush1.bf16.msra.mxu0 %v196
    %219 = vmatprep.subr.bf16.mxu0 0
    %220 = vmatpush1.bf16.msra.mxu0 %v195
    %221 = vmatprep.subr.bf16.mxu0 0
    %222 = vmatpush1.bf16.msra.mxu0 %v194
    %223 = vmatprep.subr.bf16.mxu0 0
    %224 = vmatpush1.bf16.msra.mxu0 %v193
    %225 = vmatprep.subr.bf16.mxu0 0
    %226 = vmatpush2.bf16.msra.mxu0 0
    %227 = vmatprep.subr.bf16.mxu0 0
    %228 = vmatpush2.bf16.msra.mxu0 0
    %229 = vmatprep.subr.bf16.mxu0 0
    %230 = vmatpush2.bf16.msra.mxu0 0
    %231 = vmatprep.subr.bf16.mxu0 0
    %232 = vmatpush2.bf16.msra.mxu0 0
    %233 = vmatprep.subr.bf16.mxu0 0
    %234 = vmatpush2.bf16.msra.mxu0 0
    %235 = vmatprep.subr.bf16.mxu0 0
    %236 = vmatpush2.bf16.msra.mxu0 0
    %237 = vmatprep.subr.bf16.mxu0 0
    %238 = vmatpush2.bf16.msra.mxu0 0
    %239 = vmatprep.subr.bf16.mxu0 0
    %240 = vmatpush2.bf16.msra.mxu0 0
    %241 = vmatprep.mubr.bf16.mxu0 0
    %242 = vmatmul.mubr.bf16.gmra.mxu0 %v156
    %v243 = vpop.f32.mrf.mxu0
    %v244 = vadd.f32 %v160, %v243
    %v245 = vpop.f32.mrf.mxu0
    %v246 = vpop.f32.mrf.mxu0
    %v247 = vpop.f32.mrf.mxu0
    %248 = vdwg.mxu0
    %v249 = vmax.f32 %v244, 0.0
    %v250 = vpack.c.bf16 %v249, %v249
    %v251 = vlaneseq
    %v252 = vshrl.u32 %v251, 7
    %v253 = vsub.s32 0, %v252
    %v254 = vrot.slane %v94, %v253
    %v271 = vunpack.c.l.b16 %v76
    %v272 = vunpack.c.l.b16 %v77
    %v273 = vunpack.c.l.b16 %v78
    %v274 = vunpack.c.l.b16 %v79
    %v275 = vunpack.c.l.b16 %v80
    %v276 = vunpack.c.l.b16 %v81
    %v277 = vunpack.c.l.b16 %v82
    %v278 = vunpack.c.l.b16 %v83
    %v279 = vunpack.c.l.b16 %v84
    %v280 = vunpack.c.l.b16 %v85
    %v281 = vunpack.c.l.b16 %v86
    %v282 = vunpack.c.l.b16 %v87
    %v283 = vunpack.c.l.b16 %v88
    %v284 = vunpack.c.l.b16 %v89
    %v285 = vunpack.c.l.b16 %v90
    %v286 = vunpack.c.l.b16 %v91
    %v287 = vpack.c.b16 %v272, %v271
    %v288 = vpack.c.b16 %v274, %v273
    %v289 = vpack.c.b16 %v276, %v275
    %v290 = vpack.c.b16 %v278, %v277
    %v291 = vpack.c.b16 %v280, %v279
    %v292 = vpack.c.b16 %v282, %v281
    %v293 = vpack.c.b16 %v284, %v283
    %v294 = vpack.c.b16 %v286, %v285
    %303 = vmatprep.subr.bf16.mxu0 0
    %304 = vmatpush1.bf16.msra.mxu0 %v294
    %305 = vmatprep.subr.bf16.mxu0 0
    %306 = vmatpush1.bf16.msra.mxu0 %v293
    %307 = vmatprep.subr.bf16.mxu0 0
    %308 = vmatpush1.bf16.msra.mxu0 %v292
    %309 = vmatprep.subr.bf16.mxu0 0
    %310 = vmatpush1.bf16.msra.mxu0 %v291
    %311 = vmatprep.subr.bf16.mxu0 0
    %312 = vmatpush1.bf16.msra.mxu0 %v290
    %313 = vmatprep.subr.bf16.mxu0 0
    %314 = vmatpush1.bf16.msra.mxu0 %v289
    %315 = vmatprep.subr.bf16.mxu0 0
    %316 = vmatpush1.bf16.msra.mxu0 %v288
    %317 = vmatprep.subr.bf16.mxu0 0
    %318 = vmatpush1.bf16.msra.mxu0 %v287
    %319 = vmatprep.subr.bf16.mxu0 0
    %320 = vmatpush2.bf16.msra.mxu0 0
    %321 = vmatprep.subr.bf16.mxu0 0
    %322 = vmatpush2.bf16.msra.mxu0 0
    %323 = vmatprep.subr.bf16.mxu0 0
    %324 = vmatpush2.bf16.msra.mxu0 0
    %325 = vmatprep.subr.bf16.mxu0 0
    %326 = vmatpush2.bf16.msra.mxu0 0
    %327 = vmatprep.subr.bf16.mxu0 0
    %328 = vmatpush2.bf16.msra.mxu0 0
    %329 = vmatprep.subr.bf16.mxu0 0
    %330 = vmatpush2.bf16.msra.mxu0 0
    %331 = vmatprep.subr.bf16.mxu0 0
    %332 = vmatpush2.bf16.msra.mxu0 0
    %333 = vmatprep.subr.bf16.mxu0 0
    %334 = vmatpush2.bf16.msra.mxu0 0
    %335 = vmatprep.mubr.bf16.mxu0 0
    %336 = vmatmul.mubr.bf16.gmra.mxu0 %v250
    %v337 = vpop.f32.mrf.mxu0
    %v338 = vadd.f32 %v254, %v337
    %v339 = vpop.f32.mrf.mxu0
    %v340 = vpop.f32.mrf.mxu0
    %v341 = vpop.f32.mrf.mxu0
    %342 = vdwg.mxu0
    %vm343 = vcmask 31744
    %344 = vst.msk [vmem:[%s3] sm:$0xff] %vm343, %v338
    // Predicated region
    $region26: #{dqn_forward.1} parent=1 // pred_check
      _
    $region27: #{dqn_forward.1} parent=1 // pred_check_branch
      %346 = sbr.rel (0) target = $region29
    $region28: #{dqn_forward.1} parent=1 // pred_region
      _
    $region29: #{dqn_forward.1} parent=1 // pred_fallthru
      _
    // Predicated region
    $region30: #{dqn_forward.1} parent=1 // pred_check
      _
    $region31: #{dqn_forward.1} parent=1 // pred_check_branch
      %348 = sbr.rel (0) target = $region33
    $region32: #{dqn_forward.1} parent=1 // pred_region
      _
    $region33: #{dqn_forward.1} parent=1 // pred_fallthru
      _
    %349 = vsyncpa [#allocation3], 1
    %350 = vsyncpa [#allocation5], 1

</llo_original>
